<compile_context>
chip_gen: v7x
topology: tpu7x:2x2x1
jax: 0.10.0
libtpu: 0.0.40
codegen_flags: <defaults>
</compile_context>

<pallas_src>
import functools

import jax
import jax.numpy as jnp
from jax.experimental import pallas as pl
from jax.experimental.pallas import tpu as pltpu


def _decomp_kernel(x_ref, res_ref, mean_ref, *, kernel_size: int):
    """One (Bt, L, C) block per grid step, moving average along axis 1."""
    _, L, _ = res_ref.shape
    p = (kernel_size - 1) // 2
    inv_k = 1.0 / float(kernel_size)
    f32 = jnp.float32
    out_dt = res_ref.dtype

    if p == 0:  # kernel_size == 1: mean is x itself.
        mean_ref[...] = x_ref[...]
        res_ref[...] = jnp.zeros_like(res_ref)
        return

    # Tiny per-row load cache (boundary rows only; keys are static ints).
    _rows = {}

    def row(j):
        if j not in _rows:
            _rows[j] = x_ref[:, pl.ds(j, 1), :].astype(f32)
        return _rows[j]

    def emit(t, m):
        mean_ref[:, pl.ds(t, 1), :] = m.astype(out_dt)
        res_ref[:, pl.ds(t, 1), :] = (row(t) - m).astype(out_dt)

    if L > 2 * p:
        # ---- interior rows t in [p, L-1-p]: k shifted slices read straight
        # from the input block (no padded scratch, no extra full-block store).
        Li = L - 2 * p
        acc = None
        centre = None
        for j in range(kernel_size):
            sl = x_ref[:, pl.ds(j, Li), :].astype(f32)
            if j == p:
                centre = sl  # reuse the centre term for the residual
            acc = sl if acc is None else acc + sl
        mean_int = acc * inv_k
        mean_ref[:, pl.ds(p, Li), :] = mean_int.astype(out_dt)
        res_ref[:, pl.ds(p, Li), :] = (centre - mean_int).astype(out_dt)

        # ---- front boundary rows t in [0, p-1]: replicate x[0] (p - t) times.
        s = row(0)
        for j in range(1, p + 1):
            s = s + row(j)
        for t in range(p):
            if t > 0:
                s = s + row(t + p)
            emit(t, (s + float(p - t) * row(0)) * inv_k)

        # ---- end boundary rows t in [L-p, L-1]: replicate x[L-1].
        s = row(L - 1)
        for j in range(1, p + 1):
            s = s + row(L - 1 - j)
        for i in range(p):
            if i > 0:
                s = s + row(L - 1 - i - p)
            emit(L - 1 - i, (s + float(p - i) * row(L - 1)) * inv_k)
    else:
        # Degenerate short sequences (L <= 2p): clamped window per row.
        for t in range(L):
            lo, hi = max(0, t - p), min(L - 1, t + p)
            s = row(lo)
            for j in range(lo + 1, hi + 1):
                s = s + row(j)
            s = (s + float(max(0, p - t)) * row(0)
                   + float(max(0, t + p - (L - 1))) * row(L - 1))
            emit(t, s * inv_k)


def _vmem_limit_bytes() -> int:
    """Scoped-VMEM request sized from the actual chip (v7x-safe fallback)."""
    cap = 64 * 1024 * 1024
    try:
        info = pltpu.get_tpu_info()
        cap = int(getattr(info, "vmem_capacity_bytes", cap)) or cap
    except Exception:
        pass
    # 48 MiB on v7x (64 MiB physical), 96 MiB on v5e/v6e (128 MiB physical).
    return min((cap * 3) // 4, 96 * 1024 * 1024)


def _choose_batch_tile(B: int, L: int, C: int, itemsize: int,
                       budget_bytes: int) -> int:
    """Largest batch tile whose VMEM footprint fits the budget."""
    lp = ((L + 7) // 8) * 8          # sublane padding
    cp = ((C + 127) // 128) * 128    # lane padding
    # 2x double-buffered input + 2x double-buffered outputs (itemsize) plus
    # roughly 4 f32 temporaries live at once in the kernel body.
    per_batch = lp * cp * (6 * itemsize + 4 * 4)
    bt = max(1, budget_bytes // max(per_batch, 1))
    bt = min(bt, B)
    # Prefer >= 2 grid steps: pipeline overlap + both v7x TensorCores fed.
    if B >= 2:
        bt = min(bt, pl.cdiv(B, 2))
    return bt


def series_decomp(x: jax.Array, kernel_size: int):
    """Pallas implementation of series_decomp.forward.

    x: (B, L, C) float array. Returns (res, moving_mean), both (B, L, C).
    """
    assert kernel_size % 2 == 1, "series_decomp requires an odd kernel_size"
    B, L, C = x.shape
    itemsize = jnp.dtype(x.dtype).itemsize

    vmem_limit = _vmem_limit_bytes()
    bt = _choose_batch_tile(B, L, C, itemsize, (vmem_limit * 5) // 8)
    grid = (pl.cdiv(B, bt),)

    kernel = functools.partial(_decomp_kernel, kernel_size=kernel_size)
    block = pl.BlockSpec((bt, L, C), lambda i: (i, 0, 0))

    res, mean = pl.pallas_call(
        kernel,
        out_shape=(
            jax.ShapeDtypeStruct((B, L, C), x.dtype),
            jax.ShapeDtypeStruct((B, L, C), x.dtype),
        ),
        grid_spec=pltpu.PrefetchScalarGridSpec(
            num_scalar_prefetch=0,
            grid=grid,
            in_specs=[block],
            out_specs=[
                pl.BlockSpec((bt, L, C), lambda i: (i, 0, 0)),
                pl.BlockSpec((bt, L, C), lambda i: (i, 0, 0)),
            ],
        ),
        compiler_params=pltpu.CompilerParams(
            dimension_semantics=("parallel",),
            vmem_limit_bytes=vmem_limit,
        ),
    )(x)
    return res, mean


def _reference_series_decomp(x: jax.Array, kernel_size: int):
    """Pure-JAX reference mirroring the PyTorch module (for verification)."""
    p = (kernel_size - 1) // 2
    front = jnp.repeat(x[:, 0:1, :], p, axis=1)
    end = jnp.repeat(x[:, -1:, :], p, axis=1)
    xp = jnp.concatenate([front, x, end], axis=1)
    L = x.shape[1]
    windows = jnp.stack([xp[:, j:j + L, :] for j in range(kernel_size)], axis=0)
    mean = jnp.mean(windows, axis=0)
    return x - mean, mean


if __name__ == "__main__":
    key = jax.random.PRNGKey(0)

    configs = [
        # (B, L, C, kernel_size)
        (2, 16, 8, 5),    # small, matches module usage
        (3, 32, 5, 7),    # ragged final batch block, C not a lane multiple
        (2, 8, 4, 25),    # degenerate path: window wider than the sequence
    ]

    for i, (B, L, C, k) in enumerate(configs):
        x = jax.random.normal(jax.random.fold_in(key, i), (B, L, C),
                              dtype=jnp.float32)

        res, mean = series_decomp(x, k)
        res, mean = jax.block_until_ready((res, mean))

        res_ref, mean_ref = _reference_series_decomp(x, k)
        assert jnp.allclose(mean, mean_ref, atol=1e-5, rtol=1e-5)
        assert jnp.allclose(res, res_ref, atol=1e-5, rtol=1e-5)

    print("KERNEL_OK")
</pallas_src>

<mosaic_0001>
module attributes {stable_mosaic.version = 11 : i64} {
  func.func @_decomp_kernel(%arg0: i32, %arg1: memref<1x16x8xf32, #tpu.memory_space<vmem>>, %arg2: memref<1x16x8xf32, #tpu.memory_space<vmem>>, %arg3: memref<1x16x8xf32, #tpu.memory_space<vmem>>) attributes {dimension_semantics = [#tpu.dimension_semantics<parallel>], iteration_bounds = array<i64: 2>, scalar_prefetch = 0 : i64, scratch_operands = 0 : i64, tpu.core_type = #tpu.core_type<tc>, window_params = [{transform_indices = @transform_0, window_bounds = array<i64: 1, 16, 8>}, {transform_indices = @transform_1, window_bounds = array<i64: 1, 16, 8>}, {transform_indices = @transform_2, window_bounds = array<i64: 1, 16, 8>}]} {
    %c0 = arith.constant 0 : index
    %c0_0 = arith.constant 0 : index
    %c0_1 = arith.constant 0 : index
    %0 = vector.load %arg1[%c0, %c0_0, %c0_1] : memref<1x16x8xf32, #tpu.memory_space<vmem>>, vector<1x12x8xf32>
    %c0_2 = arith.constant 0 : index
    %c1 = arith.constant 1 : index
    %c0_3 = arith.constant 0 : index
    %1 = vector.load %arg1[%c0_2, %c1, %c0_3] : memref<1x16x8xf32, #tpu.memory_space<vmem>>, vector<1x12x8xf32>
    %2 = arith.addf %0, %1 : vector<1x12x8xf32>
    %c0_4 = arith.constant 0 : index
    %c2 = arith.constant 2 : index
    %c0_5 = arith.constant 0 : index
    %3 = vector.load %arg1[%c0_4, %c2, %c0_5] : memref<1x16x8xf32, #tpu.memory_space<vmem>>, vector<1x12x8xf32>
    %4 = arith.addf %2, %3 : vector<1x12x8xf32>
    %c0_6 = arith.constant 0 : index
    %c3 = arith.constant 3 : index
    %c0_7 = arith.constant 0 : index
    %5 = vector.load %arg1[%c0_6, %c3, %c0_7] : memref<1x16x8xf32, #tpu.memory_space<vmem>>, vector<1x12x8xf32>
    %6 = arith.addf %4, %5 : vector<1x12x8xf32>
    %c0_8 = arith.constant 0 : index
    %c4 = arith.constant 4 : index
    %c0_9 = arith.constant 0 : index
    %7 = vector.load %arg1[%c0_8, %c4, %c0_9] : memref<1x16x8xf32, #tpu.memory_space<vmem>>, vector<1x12x8xf32>
    %8 = arith.addf %6, %7 : vector<1x12x8xf32>
    %cst = arith.constant 2.000000e-01 : f32
    %9 = vector.broadcast %cst : f32 to vector<1x12x8xf32>
    %10 = arith.mulf %8, %9 : vector<1x12x8xf32>
    %c0_10 = arith.constant 0 : index
    %c2_11 = arith.constant 2 : index
    %c0_12 = arith.constant 0 : index
    %11 = vector.load %arg3[%c0_10, %c2_11, %c0_12] : memref<1x16x8xf32, #tpu.memory_space<vmem>>, vector<1x12x8xf32>
    tpu.vector_store %arg3[%c0_10, %c2_11, %c0_12], %10 {strides = array<i32>} : memref<1x16x8xf32, #tpu.memory_space<vmem>>, vector<1x12x8xf32>,
    %12 = arith.subf %3, %10 : vector<1x12x8xf32>
    %c0_13 = arith.constant 0 : index
    %c2_14 = arith.constant 2 : index
    %c0_15 = arith.constant 0 : index
    %13 = vector.load %arg2[%c0_13, %c2_14, %c0_15] : memref<1x16x8xf32, #tpu.memory_space<vmem>>, vector<1x12x8xf32>
    tpu.vector_store %arg2[%c0_13, %c2_14, %c0_15], %12 {strides = array<i32>} : memref<1x16x8xf32, #tpu.memory_space<vmem>>, vector<1x12x8xf32>,
    %c0_16 = arith.constant 0 : index
    %c0_17 = arith.constant 0 : index
    %c0_18 = arith.constant 0 : index
    %14 = vector.load %arg1[%c0_16, %c0_17, %c0_18] : memref<1x16x8xf32, #tpu.memory_space<vmem>>, vector<1x1x8xf32>
    %c0_19 = arith.constant 0 : index
    %c1_20 = arith.constant 1 : index
    %c0_21 = arith.constant 0 : index
    %15 = vector.load %arg1[%c0_19, %c1_20, %c0_21] : memref<1x16x8xf32, #tpu.memory_space<vmem>>, vector<1x1x8xf32>
    %16 = arith.addf %14, %15 : vector<1x1x8xf32>
    %c0_22 = arith.constant 0 : index
    %c2_23 = arith.constant 2 : index
    %c0_24 = arith.constant 0 : index
    %17 = vector.load %arg1[%c0_22, %c2_23, %c0_24] : memref<1x16x8xf32, #tpu.memory_space<vmem>>, vector<1x1x8xf32>
    %18 = arith.addf %16, %17 : vector<1x1x8xf32>
    %cst_25 = arith.constant 2.000000e+00 : f32
    %19 = vector.broadcast %cst_25 : f32 to vector<1x1x8xf32>
    %20 = arith.mulf %19, %14 : vector<1x1x8xf32>
    %21 = arith.addf %18, %20 : vector<1x1x8xf32>
    %cst_26 = arith.constant 2.000000e-01 : f32
    %22 = vector.broadcast %cst_26 : f32 to vector<1x1x8xf32>
    %23 = arith.mulf %21, %22 : vector<1x1x8xf32>
    %c0_27 = arith.constant 0 : index
    %c0_28 = arith.constant 0 : index
    %c0_29 = arith.constant 0 : index
    %24 = vector.load %arg3[%c0_27, %c0_28, %c0_29] : memref<1x16x8xf32, #tpu.memory_space<vmem>>, vector<1x1x8xf32>
    tpu.vector_store %arg3[%c0_27, %c0_28, %c0_29], %23 {strides = array<i32>} : memref<1x16x8xf32, #tpu.memory_space<vmem>>, vector<1x1x8xf32>,
    %25 = arith.subf %14, %23 : vector<1x1x8xf32>
    %c0_30 = arith.constant 0 : index
    %c0_31 = arith.constant 0 : index
    %c0_32 = arith.constant 0 : index
    %26 = vector.load %arg2[%c0_30, %c0_31, %c0_32] : memref<1x16x8xf32, #tpu.memory_space<vmem>>, vector<1x1x8xf32>
    tpu.vector_store %arg2[%c0_30, %c0_31, %c0_32], %25 {strides = array<i32>} : memref<1x16x8xf32, #tpu.memory_space<vmem>>, vector<1x1x8xf32>,
    %c0_33 = arith.constant 0 : index
    %c3_34 = arith.constant 3 : index
    %c0_35 = arith.constant 0 : index
    %27 = vector.load %arg1[%c0_33, %c3_34, %c0_35] : memref<1x16x8xf32, #tpu.memory_space<vmem>>, vector<1x1x8xf32>
    %28 = arith.addf %18, %27 : vector<1x1x8xf32>
    %cst_36 = arith.constant 1.000000e+00 : f32
    %29 = vector.broadcast %cst_36 : f32 to vector<1x1x8xf32>
    %30 = arith.mulf %29, %14 : vector<1x1x8xf32>
    %31 = arith.addf %28, %30 : vector<1x1x8xf32>
    %cst_37 = arith.constant 2.000000e-01 : f32
    %32 = vector.broadcast %cst_37 : f32 to vector<1x1x8xf32>
    %33 = arith.mulf %31, %32 : vector<1x1x8xf32>
    %c0_38 = arith.constant 0 : index
    %c1_39 = arith.constant 1 : index
    %c0_40 = arith.constant 0 : index
    %34 = vector.load %arg3[%c0_38, %c1_39, %c0_40] : memref<1x16x8xf32, #tpu.memory_space<vmem>>, vector<1x1x8xf32>
    tpu.vector_store %arg3[%c0_38, %c1_39, %c0_40], %33 {strides = array<i32>} : memref<1x16x8xf32, #tpu.memory_space<vmem>>, vector<1x1x8xf32>,
    %35 = arith.subf %15, %33 : vector<1x1x8xf32>
    %c0_41 = arith.constant 0 : index
    %c1_42 = arith.constant 1 : index
    %c0_43 = arith.constant 0 : index
    %36 = vector.load %arg2[%c0_41, %c1_42, %c0_43] : memref<1x16x8xf32, #tpu.memory_space<vmem>>, vector<1x1x8xf32>
    tpu.vector_store %arg2[%c0_41, %c1_42, %c0_43], %35 {strides = array<i32>} : memref<1x16x8xf32, #tpu.memory_space<vmem>>, vector<1x1x8xf32>,
    %c0_44 = arith.constant 0 : index
    %c15 = arith.constant 15 : index
    %c0_45 = arith.constant 0 : index
    %37 = vector.load %arg1[%c0_44, %c15, %c0_45] : memref<1x16x8xf32, #tpu.memory_space<vmem>>, vector<1x1x8xf32>
    %c0_46 = arith.constant 0 : index
    %c14 = arith.constant 14 : index
    %c0_47 = arith.constant 0 : index
    %38 = vector.load %arg1[%c0_46, %c14, %c0_47] : memref<1x16x8xf32, #tpu.memory_space<vmem>>, vector<1x1x8xf32>
    %39 = arith.addf %37, %38 : vector<1x1x8xf32>
    %c0_48 = arith.constant 0 : index
    %c13 = arith.constant 13 : index
    %c0_49 = arith.constant 0 : index
    %40 = vector.load %arg1[%c0_48, %c13, %c0_49] : memref<1x16x8xf32, #tpu.memory_space<vmem>>, vector<1x1x8xf32>
    %41 = arith.addf %39, %40 : vector<1x1x8xf32>
    %cst_50 = arith.constant 2.000000e+00 : f32
    %42 = vector.broadcast %cst_50 : f32 to vector<1x1x8xf32>
    %43 = arith.mulf %42, %37 : vector<1x1x8xf32>
    %44 = arith.addf %41, %43 : vector<1x1x8xf32>
    %cst_51 = arith.constant 2.000000e-01 : f32
    %45 = vector.broadcast %cst_51 : f32 to vector<1x1x8xf32>
    %46 = arith.mulf %44, %45 : vector<1x1x8xf32>
    %c0_52 = arith.constant 0 : index
    %c15_53 = arith.constant 15 : index
    %c0_54 = arith.constant 0 : index
    %47 = vector.load %arg3[%c0_52, %c15_53, %c0_54] : memref<1x16x8xf32, #tpu.memory_space<vmem>>, vector<1x1x8xf32>
    tpu.vector_store %arg3[%c0_52, %c15_53, %c0_54], %46 {strides = array<i32>} : memref<1x16x8xf32, #tpu.memory_space<vmem>>, vector<1x1x8xf32>,
    %48 = arith.subf %37, %46 : vector<1x1x8xf32>
    %c0_55 = arith.constant 0 : index
    %c15_56 = arith.constant 15 : index
    %c0_57 = arith.constant 0 : index
    %49 = vector.load %arg2[%c0_55, %c15_56, %c0_57] : memref<1x16x8xf32, #tpu.memory_space<vmem>>, vector<1x1x8xf32>
    tpu.vector_store %arg2[%c0_55, %c15_56, %c0_57], %48 {strides = array<i32>} : memref<1x16x8xf32, #tpu.memory_space<vmem>>, vector<1x1x8xf32>,
    %c0_58 = arith.constant 0 : index
    %c12 = arith.constant 12 : index
    %c0_59 = arith.constant 0 : index
    %50 = vector.load %arg1[%c0_58, %c12, %c0_59] : memref<1x16x8xf32, #tpu.memory_space<vmem>>, vector<1x1x8xf32>
    %51 = arith.addf %41, %50 : vector<1x1x8xf32>
    %cst_60 = arith.constant 1.000000e+00 : f32
    %52 = vector.broadcast %cst_60 : f32 to vector<1x1x8xf32>
    %53 = arith.mulf %52, %37 : vector<1x1x8xf32>
    %54 = arith.addf %51, %53 : vector<1x1x8xf32>
    %cst_61 = arith.constant 2.000000e-01 : f32
    %55 = vector.broadcast %cst_61 : f32 to vector<1x1x8xf32>
    %56 = arith.mulf %54, %55 : vector<1x1x8xf32>
    %c0_62 = arith.constant 0 : index
    %c14_63 = arith.constant 14 : index
    %c0_64 = arith.constant 0 : index
    %57 = vector.load %arg3[%c0_62, %c14_63, %c0_64] : memref<1x16x8xf32, #tpu.memory_space<vmem>>, vector<1x1x8xf32>
    tpu.vector_store %arg3[%c0_62, %c14_63, %c0_64], %56 {strides = array<i32>} : memref<1x16x8xf32, #tpu.memory_space<vmem>>, vector<1x1x8xf32>,
    %58 = arith.subf %38, %56 : vector<1x1x8xf32>
    %c0_65 = arith.constant 0 : index
    %c14_66 = arith.constant 14 : index
    %c0_67 = arith.constant 0 : index
    %59 = vector.load %arg2[%c0_65, %c14_66, %c0_67] : memref<1x16x8xf32, #tpu.memory_space<vmem>>, vector<1x1x8xf32>
    tpu.vector_store %arg2[%c0_65, %c14_66, %c0_67], %58 {strides = array<i32>} : memref<1x16x8xf32, #tpu.memory_space<vmem>>, vector<1x1x8xf32>,
    return
  }
  func.func @transform_0(%arg0: i32) -> (i32, i32, i32) {
    %c0_i32 = arith.constant 0 : i32
    %c0_i32_0 = arith.constant 0 : i32
    %c0_i32_1 = arith.constant 0 : i32
    return %arg0, %c0_i32, %c0_i32_0 : i32, i32, i32
  }
  func.func @transform_1(%arg0: i32) -> (i32, i32, i32) {
    %c0_i32 = arith.constant 0 : i32
    %c0_i32_0 = arith.constant 0 : i32
    %c0_i32_1 = arith.constant 0 : i32
    return %arg0, %c0_i32, %c0_i32_0 : i32, i32, i32
  }
  func.func @transform_2(%arg0: i32) -> (i32, i32, i32) {
    %c0_i32 = arith.constant 0 : i32
    %c0_i32_0 = arith.constant 0 : i32
    %c0_i32_1 = arith.constant 0 : i32
    return %arg0, %c0_i32, %c0_i32_0 : i32, i32, i32
  }
}

</mosaic_0001>

<llo_original>
// kernel: tpu_custom_call.1
$region0: #{tpu_custom_call.1}
  #allocation0 [shape = 'u32[]', space=smem, size = 0x4, offset = 0x4, fixed_abs, tag = 'smem constant byte address 0x4 - core index']
  #allocation1 [shape = 'u32[144,128]{1,0:T(1,128)}', space=vmem, size = 0x12000, scoped, tag = 'internal scratch']
  %s0 = inlined_call_operand.vmem [shape: f32[2,16,8], index: 0, kind: input, shape index: {}]
  %s1 = inlined_call_operand.vmem [shape: f32[2,16,8], index: 1, kind: output, shape index: {0}]
  %s2 = inlined_call_operand.vmem [shape: f32[2,16,8], index: 2, kind: output, shape index: {1}]
  %3 = xla_tuple %s1, %s2
  %s4 = sld [smem:[#allocation0]]
  $region45: #{tpu_custom_call.1} parent=0
    _
  %s6 = ssub.s32 1, %s4
  %s7 = scalar_select 0, %s6, %s4
  loop: start=0, step=1, limit=4
  $region2: #{tpu_custom_call.1} parent=0 // loop_pre_header
    _
  $region3: #{tpu_custom_call.1} parent=0 // loop_header
    %s9 = sphi 0, %s13
    %p10 = scmp.ge.s32.totalorder %s9, 4
    %s19 = sphi 0, %s21
    %s22 = sphi 0, %s19
    %s23 = sphi 0, %s22
    %s39 = sphi 0, %s23
    %s45 = sphi 0, %s47
    %s48 = sphi 0, %s45
    %s49 = sphi 0, %s48
    %s65 = sphi 0, %s49
    %s71 = sphi 0, %s73
    %s74 = sphi 0, %s71
    %s75 = sphi 0, %s74
    %s91 = sphi 0, %s75
  $region4: #{tpu_custom_call.1} parent=0 // loop_header_branch
    %12 = sbr.rel (%p10) target = $region8
  $region5: #{tpu_custom_call.1} parent=0 // loop_body
    %s14 = ssub.s32 %s9, 1
    %s15 = ssub.s32 %s9, 2
    %s16 = sadd.s32 %s9, 1
    %s17 = ssub.s32 %s9, %s16
    %p18 = scmp.eq.s32.totalorder %s17, 0
    %s20 = sadd.s32 %s19, 1
    %s21 = scalar_select %p18, %s19, %s20
    %p24 = pneg %p18
    %p25 = scmp.eq.s32.totalorder %s9, 1
    %p26 = por %p24, %p25
    %p27 = scmp.ne.s32.totalorder %s19, %s22
    %p28 = scmp.eq.s32.totalorder %s9, 0
    %p29 = por %p27, %p28
    %p30 = scmp.ne.s32.totalorder %s19, %s22
    %p31 = scmp.eq.s32.totalorder %s14, 1
    %p32 = por %p30, %p31
    %p33 = scmp.ne.s32.totalorder %s22, %s23
    %p34 = scmp.eq.s32.totalorder %s14, 0
    %p35 = por %p33, %p34
    %p36 = scmp.ne.s32.totalorder %s22, %s23
    %p37 = scmp.eq.s32.totalorder %s15, 1
    %p38 = por %p36, %p37
    %p40 = scmp.ne.s32.totalorder %s23, %s39
    %p41 = scmp.eq.s32.totalorder %s15, 0
    %p42 = por %p40, %p41
    %s43 = ssub.s32 %s9, %s16
    %p44 = scmp.eq.s32.totalorder %s43, 0
    %s46 = sadd.s32 %s45, 1
    %s47 = scalar_select %p44, %s45, %s46
    %p50 = pneg %p44
    %p51 = scmp.eq.s32.totalorder %s9, 1
    %p52 = por %p50, %p51
    %p53 = scmp.ne.s32.totalorder %s45, %s48
    %p54 = scmp.eq.s32.totalorder %s9, 0
    %p55 = por %p53, %p54
    %p56 = scmp.ne.s32.totalorder %s45, %s48
    %p57 = scmp.eq.s32.totalorder %s14, 1
    %p58 = por %p56, %p57
    %p59 = scmp.ne.s32.totalorder %s48, %s49
    %p60 = scmp.eq.s32.totalorder %s14, 0
    %p61 = por %p59, %p60
    %p62 = scmp.ne.s32.totalorder %s48, %s49
    %p63 = scmp.eq.s32.totalorder %s15, 1
    %p64 = por %p62, %p63
    %p66 = scmp.ne.s32.totalorder %s49, %s65
    %p67 = scmp.eq.s32.totalorder %s15, 0
    %p68 = por %p66, %p67
    %s69 = ssub.s32 %s9, %s16
    %p70 = scmp.eq.s32.totalorder %s69, 0
    %s72 = sadd.s32 %s71, 1
    %s73 = scalar_select %p70, %s71, %s72
    %p76 = pneg %p70
    %p77 = scmp.eq.s32.totalorder %s9, 1
    %p78 = por %p76, %p77
    %p79 = scmp.ne.s32.totalorder %s71, %s74
    %p80 = scmp.eq.s32.totalorder %s9, 0
    %p81 = por %p79, %p80
    %p82 = scmp.ne.s32.totalorder %s71, %s74
    %p83 = scmp.eq.s32.totalorder %s14, 1
    %p84 = por %p82, %p83
    %p85 = scmp.ne.s32.totalorder %s74, %s75
    %p86 = scmp.eq.s32.totalorder %s14, 0
    %p87 = por %p85, %p86
    %p88 = scmp.ne.s32.totalorder %s74, %s75
    %p89 = scmp.eq.s32.totalorder %s15, 1
    %p90 = por %p88, %p89
    %p92 = scmp.ne.s32.totalorder %s75, %s91
    %p93 = scmp.eq.s32.totalorder %s15, 0
    %p94 = por %p92, %p93
    %p95 = scmp.le.s32.totalorder 1, %s9
    %p96 = scmp.lt.s32.totalorder %s9, 3
    %p97 = pnand %p95, %p96
    %p98 = pneg %p97
    // Predicated region
    $region9: #{tpu_custom_call.1} parent=5 // pred_check
      _
    $region10: #{tpu_custom_call.1} parent=5 // pred_check_branch
      %100 = sbr.rel (%p97) target = $region12
    $region11: #{tpu_custom_call.1} parent=5 // pred_region
      %s101 = ssub.s32 %s9, 1
    $region12: #{tpu_custom_call.1} parent=5 // pred_fallthru
      _
    %p102 = scmp.lt.s32.totalorder %s9, 2
    // Predicated region
    $region13: #{tpu_custom_call.1} parent=5 // pred_check
      %p103 = pneg %p102
    $region14: #{tpu_custom_call.1} parent=5 // pred_check_branch
      %105 = sbr.rel (%p103) target = $region16
    $region15: #{tpu_custom_call.1} parent=5 // pred_region
      // Predicated region
      $region17: #{tpu_custom_call.1} parent=15 // pred_check
        %p106 = pneg %p29
      $region18: #{tpu_custom_call.1} parent=15 // pred_check_branch
        %108 = sbr.rel (%p106) target = $region20
      $region19: #{tpu_custom_call.1} parent=15 // pred_region
        %p109 = scmp.lt.s32.totalorder %s9, 1
        %s110 = scalar_select %p109, %s9, 1
        %s111 = smul.addr %s110, 2
        %s112 = smul.addr %s111, 8
        %s113 = scalar_lea.vmem %s0, %s112
      $region20: #{tpu_custom_call.1} parent=15 // pred_fallthru
        _
    $region16: #{tpu_custom_call.1} parent=5 // pred_fallthru
      _
    %p114 = scmp.le.s32.totalorder 1, %s9
    %p115 = scmp.lt.s32.totalorder %s9, 3
    %p116 = pnand %p114, %p115
    %p117 = pneg %p116
    // Predicated region
    $region21: #{tpu_custom_call.1} parent=5 // pred_check
      _
    $region22: #{tpu_custom_call.1} parent=5 // pred_check_branch
      %119 = sbr.rel (%p116) target = $region24
    $region23: #{tpu_custom_call.1} parent=5 // pred_region
      %s120 = ssub.s32 %s9, 1
      %p121 = scmp.lt.s32.totalorder %s14, 1
      %s122 = scalar_select %p121, %s14, 1
      %s123 = smul.addr %s122, 2
      %s124 = smul.addr %s123, 8
      %s125 = scalar_lea.vmem %s0, %s124
      %p126 = pneg %p35
      %p127 = pneg %p32
      %p128 = pneg %p61
      %p129 = pneg %p58
      %p130 = scmp.lt.s32.totalorder %s14, 1
      %s131 = scalar_select %p130, %s14, 1
      %s132 = smul.addr %s131, 2
      %s133 = smul.addr %s132, 8
      %s134 = scalar_lea.vmem %s1, %s133
      %p135 = pneg %p87
      %p136 = pneg %p84
      %p137 = scmp.lt.s32.totalorder %s14, 1
      %s138 = scalar_select %p137, %s14, 1
      %s139 = smul.addr %s138, 2
      %s140 = smul.addr %s139, 8
      %s141 = scalar_lea.vmem %s2, %s140
      %p142 = scmp.lt.s32.totalorder %s14, 1
      %s143 = scalar_select %p142, %s14, 1
      %s144 = smul.addr %s143, 2
      %s145 = smul.addr %s144, 8
      %s146 = scalar_lea.vmem %s0, %s145
      %p147 = scmp.lt.s32.totalorder %s14, 1
      %s148 = scalar_select %p147, %s14, 1
      %s149 = smul.addr %s148, 2
      %s150 = smul.addr %s149, 8
      %s151 = scalar_lea.vmem %s1, %s150
      %p152 = scmp.lt.s32.totalorder %s14, 1
      %s153 = scalar_select %p152, %s14, 1
      %s154 = smul.addr %s153, 2
      %s155 = smul.addr %s154, 8
      %s156 = scalar_lea.vmem %s2, %s155
      %v157 = vld [vmem:[%s146] sm:$0xff]
      %v158 = vld [vmem:[%s146 + $0x8] sm:$0xf]
      %v159 = vld [vmem:[%s146 + $0x1] sm:$0xff]
      %v160 = vld [vmem:[%s146 + $0x9] sm:$0xf]
      %v161 = vadd.f32 %v157, %v159
      %v162 = vadd.f32 %v158, %v160
      %v163 = vld [vmem:[%s146 + $0x2] sm:$0xff]
      %v164 = vld [vmem:[%s146 + $0xa] sm:$0xf]
      %v165 = vadd.f32 %v161, %v163
      %v166 = vadd.f32 %v162, %v164
      %v167 = vld [vmem:[%s146 + $0x3] sm:$0xff]
      %v168 = vld [vmem:[%s146 + $0xb] sm:$0xf]
      %v169 = vadd.f32 %v165, %v167
      %v170 = vadd.f32 %v166, %v168
      %v171 = vld [vmem:[%s146 + $0x4] sm:$0xff]
      %v172 = vld [vmem:[%s146 + $0xc] sm:$0xf]
      %v173 = vadd.f32 %v169, %v171
      %v174 = vadd.f32 %v170, %v172
      %v175 = vmul.f32 %v173, 0.2
      %v176 = vmul.f32 %v174, 0.2
      %vm177 = vcmask 64512
      %178 = vst.msk [vmem:[%s156 + $0x2] sm:$0xff] %vm177, %v175
      %vm179 = vcmask 60416
      %180 = vst.msk [vmem:[%s156 + $0xa] sm:$0xf] %vm179, %v176
      %v181 = vsub.f32 %v163, %v175
      %v182 = vsub.f32 %v164, %v176
      %183 = vst.msk [vmem:[%s151 + $0x2] sm:$0xff] %vm177, %v181
      %184 = vst.msk [vmem:[%s151 + $0xa] sm:$0xf] %vm179, %v182
      %v185 = vld [vmem:[%s146] sm:$0x1]
      %v186 = vld [vmem:[%s146 + $0x1] sm:$0x1]
      %v187 = vadd.f32 %v185, %v186
      %v188 = vld [vmem:[%s146 + $0x2] sm:$0x1]
      %v189 = vadd.f32 %v187, %v188
      %v190 = vmul.f32 %v185, 2.0
      %v191 = vadd.f32 %v189, %v190
      %v192 = vmul.f32 %v191, 0.2
      %vm193 = vcmask 57344
      %194 = vst.msk [vmem:[%s156] sm:$0x1] %vm193, %v192
      %v195 = vsub.f32 %v185, %v192
      %196 = vst.msk [vmem:[%s151] sm:$0x1] %vm193, %v195
      %v197 = vld [vmem:[%s146 + $0x3] sm:$0x1]
      %v198 = vadd.f32 %v189, %v197
      %v199 = vadd.f32 %v198, %v185
      %v200 = vmul.f32 %v199, 0.2
      %201 = vst.msk [vmem:[%s156 + $0x1] sm:$0x1] %vm193, %v200
      %v202 = vsub.f32 %v186, %v200
      %203 = vst.msk [vmem:[%s151 + $0x1] sm:$0x1] %vm193, %v202
      %v204 = vld [vmem:[%s146 + $0xf] sm:$0x1]
      %v205 = vld [vmem:[%s146 + $0xe] sm:$0x1]
      %v206 = vadd.f32 %v204, %v205
      %v207 = vld [vmem:[%s146 + $0xd] sm:$0x1]
      %v208 = vadd.f32 %v206, %v207
      %v209 = vmul.f32 %v204, 2.0
      %v210 = vadd.f32 %v208, %v209
      %v211 = vmul.f32 %v210, 0.2
      %212 = vst.msk [vmem:[%s156 + $0xf] sm:$0x1] %vm193, %v211
      %v213 = vsub.f32 %v204, %v211
      %214 = vst.msk [vmem:[%s151 + $0xf] sm:$0x1] %vm193, %v213
      %v215 = vld [vmem:[%s146 + $0xc] sm:$0x1]
      %v216 = vadd.f32 %v208, %v215
      %v217 = vadd.f32 %v216, %v204
      %v218 = vmul.f32 %v217, 0.2
      %219 = vst.msk [vmem:[%s156 + $0xe] sm:$0x1] %vm193, %v218
      %v220 = vsub.f32 %v205, %v218
      %221 = vst.msk [vmem:[%s151 + $0xe] sm:$0x1] %vm193, %v220
      %p222 = scmp.lt.s32.totalorder %s14, 1
      %s223 = scalar_select %p222, %s14, 1
      %s224 = smul.addr %s223, 2
      %s225 = smul.addr %s224, 8
      %s226 = scalar_lea.vmem %s1, %s225
      %p227 = scmp.lt.s32.totalorder %s14, 1
      %s228 = scalar_select %p227, %s14, 1
      %s229 = smul.addr %s228, 2
      %s230 = smul.addr %s229, 8
      %s231 = scalar_lea.vmem %s2, %s230
      // Predicated region
      $region25: #{tpu_custom_call.1} parent=23 // pred_check
        %p232 = pneg %p58
      $region26: #{tpu_custom_call.1} parent=23 // pred_check_branch
        %234 = sbr.rel (%p232) target = $region28
      $region27: #{tpu_custom_call.1} parent=23 // pred_region
        _
      $region28: #{tpu_custom_call.1} parent=23 // pred_fallthru
        _
      // Predicated region
      $region29: #{tpu_custom_call.1} parent=23 // pred_check
        %p235 = pneg %p84
      $region30: #{tpu_custom_call.1} parent=23 // pred_check_branch
        %237 = sbr.rel (%p235) target = $region32
      $region31: #{tpu_custom_call.1} parent=23 // pred_region
        _
      $region32: #{tpu_custom_call.1} parent=23 // pred_fallthru
        _
    $region24: #{tpu_custom_call.1} parent=5 // pred_fallthru
      _
    %p238 = scmp.le.s32.totalorder 2, %s9
    // Predicated region
    $region33: #{tpu_custom_call.1} parent=5 // pred_check
      %p239 = pneg %p238
    $region34: #{tpu_custom_call.1} parent=5 // pred_check_branch
      %241 = sbr.rel (%p239) target = $region36
    $region35: #{tpu_custom_call.1} parent=5 // pred_region
      %s242 = ssub.s32 %s9, 2
      // Predicated region
      $region37: #{tpu_custom_call.1} parent=35 // pred_check
        %p243 = pneg %p64
      $region38: #{tpu_custom_call.1} parent=35 // pred_check_branch
        %245 = sbr.rel (%p243) target = $region40
      $region39: #{tpu_custom_call.1} parent=35 // pred_region
        %p246 = scmp.lt.s32.totalorder %s15, 1
        %s247 = scalar_select %p246, %s15, 1
        %s248 = smul.addr %s247, 2
        %s249 = smul.addr %s248, 8
        %s250 = scalar_lea.vmem %s1, %s249
      $region40: #{tpu_custom_call.1} parent=35 // pred_fallthru
        _
      // Predicated region
      $region41: #{tpu_custom_call.1} parent=35 // pred_check
        %p251 = pneg %p90
      $region42: #{tpu_custom_call.1} parent=35 // pred_check_branch
        %253 = sbr.rel (%p251) target = $region44
      $region43: #{tpu_custom_call.1} parent=35 // pred_region
        %p254 = scmp.lt.s32.totalorder %s15, 1
        %s255 = scalar_select %p254, %s15, 1
        %s256 = smul.addr %s255, 2
        %s257 = smul.addr %s256, 8
        %s258 = scalar_lea.vmem %s2, %s257
      $region44: #{tpu_custom_call.1} parent=35 // pred_fallthru
        _
    $region36: #{tpu_custom_call.1} parent=5 // pred_fallthru
      _
  $region6: #{tpu_custom_call.1} parent=0 // loop_footer
    %s13 = sadd.s32 1, %s9
  $region7: #{tpu_custom_call.1} parent=0 // loop_footer_branch
    %8 = sbr.rel target = $region3
  $region8: #{tpu_custom_call.1} parent=0 // loop_exit
    _

</llo_original>
